<compile_context>
chip_gen: v6e
topology: v6e:2x2x1
jax: 0.10.0
libtpu: 0.0.40
codegen_flags: <defaults>
</compile_context>

<pallas_src>
import jax
import jax.numpy as jnp
from jax import lax
from jax.experimental import pallas as pl
from jax.experimental.pallas import tpu as pltpu

HIDDEN = 32
OUT_DIM = 2


def mlp_kernel(x_ref, w1_ref, b1_ref, w2_ref, b2_ref, o_ref):
    # Hidden layer: contract x (TM, D) with w1 (HIDDEN, D) over D -> (TM, HIDDEN).
    # No in-kernel transposes / relayouts; same MXU cost either orientation.
    h = lax.dot_general(
        x_ref[...], w1_ref[...],
        dimension_numbers=(((1,), (1,)), ((), ())),
        preferred_element_type=jnp.float32,
    )
    h = jnp.maximum(h + b1_ref[...], 0.0)          # b1_ref is (1, HIDDEN), row broadcast

    # Output layer, transposed: w2 (OUT_DIM, HIDDEN) x h (TM, HIDDEN) -> (OUT_DIM, TM).
    # Lane axis is the batch tile -> lane-dense stores, tiny (OUT_DIM x TM) writeback.
    out_t = lax.dot_general(
        w2_ref[...], h,
        dimension_numbers=(((1,), (1,)), ((), ())),
        preferred_element_type=jnp.float32,
    )
    o_ref[...] = (out_t + b2_ref[...]).astype(o_ref.dtype)   # b2_ref is (OUT_DIM, 1)


def _round_up(n, m):
    return ((n + m - 1) // m) * m


def simple_net(x, w1, b1, w2, b2):
    """Fused forward pass of SimpleNet.

    x:  (B, input_dim) float32
    w1: (32, input_dim), b1: (32,)   (PyTorch Linear layout, passed through unchanged)
    w2: (2, 32),         b2: (2,)
    returns (B, 2) float32
    """
    B, input_dim = x.shape

    # --- trace-time param prep (reshapes only; no transposes / copies) --------------
    b1_2d = b1.reshape(1, HIDDEN)       # (1, HIDDEN) row-broadcast bias
    b2_2d = b2.reshape(OUT_DIM, 1)      # (OUT_DIM, 1) column-broadcast bias

    # --- batch tiling ----------------------------------------------------------------
    MAX_TM = 2048
    B_pad8 = _round_up(B, 8)
    if B_pad8 <= 256:
        # Tiny workload: one full-extent tile; launch overhead dominates anyway.
        TM = B_pad8
    else:
        # Lane-friendly tile (multiple of 128), capped, and >= 2 grid steps so the
        # "parallel" batch axis can shard across both TensorCores on v7x.
        TM = min(MAX_TM, _round_up(-(-B_pad8 // 2), 128))
    B_pad = _round_up(B, TM)
    if B_pad != B:
        x = jnp.pad(x, ((0, B_pad - B), (0, 0)))   # padded rows sliced off below
    grid = (B_pad // TM,)

    weight_bytes = (w1.size + b1.size + w2.size + b2.size) * 4
    cost = pl.CostEstimate(
        flops=2 * B_pad * (input_dim * HIDDEN + HIDDEN * OUT_DIM),
        transcendentals=0,
        bytes_accessed=B_pad * input_dim * 4 + OUT_DIM * B_pad * 4 + weight_bytes,
    )

    out_pad = pl.pallas_call(
        mlp_kernel,
        out_shape=jax.ShapeDtypeStruct((OUT_DIM, B_pad), jnp.float32),
        grid=grid,
        in_specs=[
            pl.BlockSpec((TM, input_dim), lambda i: (i, 0)),       # streamed x tile
            pl.BlockSpec((HIDDEN, input_dim), lambda i: (0, 0)),   # resident W1
            pl.BlockSpec((1, HIDDEN), lambda i: (0, 0)),           # resident b1
            pl.BlockSpec((OUT_DIM, HIDDEN), lambda i: (0, 0)),     # resident W2
            pl.BlockSpec((OUT_DIM, 1), lambda i: (0, 0)),          # resident b2
        ],
        out_specs=pl.BlockSpec((OUT_DIM, TM), lambda i: (0, i)),   # lane-dense (2, TM) tile
        compiler_params=pltpu.CompilerParams(
            dimension_semantics=("parallel",),      # shard batch tiles across TCs on v7x
            vmem_limit_bytes=32 * 1024 * 1024,      # safe on v5e/v6e/v7x; tiles are tiny
        ),
        cost_estimate=cost,
    )(x, w1, b1_2d, w2, b2_2d)

    return out_pad[:, :B].T


def reference(x, w1, b1, w2, b2):
    h = jnp.maximum(x @ w1.T + b1, 0.0)
    return h @ w2.T + b2


if __name__ == "__main__":
    key = jax.random.PRNGKey(0)
    batch, input_dim = 8, 16

    kx, k1, kb1, k2, kb2 = jax.random.split(key, 5)
    x = jax.random.normal(kx, (batch, input_dim), dtype=jnp.float32)
    # Deterministic parameter init (uniform like PyTorch's default Linear init bounds).
    w1 = jax.random.uniform(k1, (HIDDEN, input_dim), jnp.float32,
                            -1.0 / input_dim ** 0.5, 1.0 / input_dim ** 0.5)
    b1 = jax.random.uniform(kb1, (HIDDEN,), jnp.float32,
                            -1.0 / input_dim ** 0.5, 1.0 / input_dim ** 0.5)
    w2 = jax.random.uniform(k2, (OUT_DIM, HIDDEN), jnp.float32,
                            -1.0 / HIDDEN ** 0.5, 1.0 / HIDDEN ** 0.5)
    b2 = jax.random.uniform(kb2, (OUT_DIM,), jnp.float32,
                            -1.0 / HIDDEN ** 0.5, 1.0 / HIDDEN ** 0.5)

    out = simple_net(x, w1, b1, w2, b2)
    jax.block_until_ready(out)

    ref = reference(x, w1, b1, w2, b2)
    assert out.shape == (batch, OUT_DIM)
    assert jnp.allclose(out, ref, atol=1e-5, rtol=1e-5)
    print("KERNEL_OK")
</pallas_src>

<mosaic_0001>
module attributes {stable_mosaic.version = 11 : i64} {
  func.func @mlp_kernel(%arg0: i32, %arg1: memref<8x16xf32, #tpu.memory_space<vmem>>, %arg2: memref<32x16xf32, #tpu.memory_space<vmem>>, %arg3: memref<1x32xf32, #tpu.memory_space<vmem>>, %arg4: memref<2x32xf32, #tpu.memory_space<vmem>>, %arg5: memref<2x1xf32, #tpu.memory_space<vmem>>, %arg6: memref<2x8xf32, #tpu.memory_space<vmem>>) attributes {dimension_semantics = [#tpu.dimension_semantics<parallel>], iteration_bounds = array<i64: 1>, scalar_prefetch = 0 : i64, scratch_operands = 0 : i64, tpu.core_type = #tpu.core_type<tc>, window_params = [{transform_indices = @transform_0, window_bounds = array<i64: 8, 16>}, {pipeline_mode = #tpu.pipeline_mode<synchronous>, transform_indices = @transform_1, window_bounds = array<i64: 32, 16>}, {pipeline_mode = #tpu.pipeline_mode<synchronous>, transform_indices = @transform_2, window_bounds = array<i64: 1, 32>}, {pipeline_mode = #tpu.pipeline_mode<synchronous>, transform_indices = @transform_3, window_bounds = array<i64: 2, 32>}, {pipeline_mode = #tpu.pipeline_mode<synchronous>, transform_indices = @transform_4, window_bounds = array<i64: 2, 1>}, {transform_indices = @transform_5, window_bounds = array<i64: 2, 8>}]} {
    %c0 = arith.constant 0 : index
    %c0_0 = arith.constant 0 : index
    %0 = vector.load %arg1[%c0, %c0_0] : memref<8x16xf32, #tpu.memory_space<vmem>>, vector<8x16xf32>
    %c0_1 = arith.constant 0 : index
    %c0_2 = arith.constant 0 : index
    %1 = vector.load %arg2[%c0_1, %c0_2] : memref<32x16xf32, #tpu.memory_space<vmem>>, vector<32x16xf32>
    %cst = arith.constant dense<0.000000e+00> : vector<8x32xf32>
    %2 = tpu.matmul %0, %1, %cst {dimension_numbers = #tpu.dot_dimension_numbers<[1], [1], [0], [0], [0, 0, 1, 0], [], []>} : vector<8x16xf32>, vector<32x16xf32>, vector<8x32xf32> -> vector<8x32xf32>
    %c0_3 = arith.constant 0 : index
    %c0_4 = arith.constant 0 : index
    %3 = vector.load %arg3[%c0_3, %c0_4] : memref<1x32xf32, #tpu.memory_space<vmem>>, vector<1x32xf32>
    %4 = vector.broadcast %3 : vector<1x32xf32> to vector<8x32xf32>
    %5 = arith.addf %2, %4 : vector<8x32xf32>
    %cst_5 = arith.constant 0.000000e+00 : f32
    %6 = vector.broadcast %cst_5 : f32 to vector<8x32xf32>
    %7 = arith.maximumf %5, %6 : vector<8x32xf32>
    %c0_6 = arith.constant 0 : index
    %c0_7 = arith.constant 0 : index
    %8 = vector.load %arg4[%c0_6, %c0_7] : memref<2x32xf32, #tpu.memory_space<vmem>>, vector<2x32xf32>
    %cst_8 = arith.constant dense<0.000000e+00> : vector<2x8xf32>
    %9 = tpu.matmul %8, %7, %cst_8 {dimension_numbers = #tpu.dot_dimension_numbers<[1], [1], [0], [0], [0, 0, 1, 0], [], []>} : vector<2x32xf32>, vector<8x32xf32>, vector<2x8xf32> -> vector<2x8xf32>
    %c0_9 = arith.constant 0 : index
    %c0_10 = arith.constant 0 : index
    %10 = vector.load %arg5[%c0_9, %c0_10] : memref<2x1xf32, #tpu.memory_space<vmem>>, vector<2x1xf32>
    %11 = vector.broadcast %10 : vector<2x1xf32> to vector<2x8xf32>
    %12 = arith.addf %9, %11 : vector<2x8xf32>
    %c0_11 = arith.constant 0 : index
    %c0_12 = arith.constant 0 : index
    %13 = vector.load %arg6[%c0_11, %c0_12] : memref<2x8xf32, #tpu.memory_space<vmem>>, vector<2x8xf32>
    tpu.vector_store %arg6[%c0_11, %c0_12], %12 {strides = array<i32>} : memref<2x8xf32, #tpu.memory_space<vmem>>, vector<2x8xf32>,
    return
  }
  func.func @transform_0(%arg0: i32) -> (i32, i32) {
    %c0_i32 = arith.constant 0 : i32
    %c0_i32_0 = arith.constant 0 : i32
    return %arg0, %c0_i32 : i32, i32
  }
  func.func @transform_1(%arg0: i32) -> (i32, i32) {
    %c0_i32 = arith.constant 0 : i32
    %c0_i32_0 = arith.constant 0 : i32
    %c0_i32_1 = arith.constant 0 : i32
    return %c0_i32, %c0_i32_0 : i32, i32
  }
  func.func @transform_2(%arg0: i32) -> (i32, i32) {
    %c0_i32 = arith.constant 0 : i32
    %c0_i32_0 = arith.constant 0 : i32
    %c0_i32_1 = arith.constant 0 : i32
    return %c0_i32, %c0_i32_0 : i32, i32
  }
  func.func @transform_3(%arg0: i32) -> (i32, i32) {
    %c0_i32 = arith.constant 0 : i32
    %c0_i32_0 = arith.constant 0 : i32
    %c0_i32_1 = arith.constant 0 : i32
    return %c0_i32, %c0_i32_0 : i32, i32
  }
  func.func @transform_4(%arg0: i32) -> (i32, i32) {
    %c0_i32 = arith.constant 0 : i32
    %c0_i32_0 = arith.constant 0 : i32
    %c0_i32_1 = arith.constant 0 : i32
    return %c0_i32, %c0_i32_0 : i32, i32
  }
  func.func @transform_5(%arg0: i32) -> (i32, i32) {
    %c0_i32 = arith.constant 0 : i32
    %c0_i32_0 = arith.constant 0 : i32
    return %c0_i32, %arg0 : i32, i32
  }
}

</mosaic_0001>

<llo_original>
// kernel: tpu_custom_call.1
$region0: #{tpu_custom_call.1}
  #allocation0 [shape = 'u32[]', space=smem, size = 0x4, offset = 0x4, fixed_abs, tag = 'smem constant byte address 0x4 - core index']
  #allocation1 [shape = 'u32[144,128]{1,0:T(1,128)}', space=vmem, size = 0x12000, scoped, tag = 'internal scratch']
  %s0 = inlined_call_operand.vmem [shape: f32[8,16], index: 0, kind: input, shape index: {}]
  %s1 = inlined_call_operand.vmem [shape: f32[32,16], index: 1, kind: input, shape index: {}]
  %s2 = inlined_call_operand.vmem [shape: f32[1,32], index: 2, kind: input, shape index: {}]
  %s3 = inlined_call_operand.vmem [shape: f32[2,32], index: 3, kind: input, shape index: {}]
  %s4 = inlined_call_operand.vmem [shape: f32[2,1], index: 4, kind: input, shape index: {}]
  %s5 = inlined_call_operand.hbm [shape: f32[2,8], index: 5, kind: output, shape index: {}]
  %s6 = sld [smem:[#allocation0]]
  $region30: #{tpu_custom_call.1} parent=0
    _
  %s8 = ssub.s32 1, %s6
  %s9 = scalar_select 0, %s8, %s6
  $region1: #{tpu_custom_call.1} parent=0
    #allocation2 [shape = 'u8[1024]{0}', space=vmem, size = 0x400, scoped, tag = 'output window, operand 0, single buffered']
    #allocation3 [shape = 's32[1]{0}', space=sflag, size = 0x4, scoped, tag = 'scoped memory for tpu_custom_call.1']
    %10 = vsyncpa [#allocation3], 0
    // Predicated region
    $region2: #{tpu_custom_call.1} parent=1 // pred_check
      _
    $region3: #{tpu_custom_call.1} parent=1 // pred_check_branch
      %12 = sbr.rel (0) target = $region5
    $region4: #{tpu_custom_call.1} parent=1 // pred_region
      _
    $region5: #{tpu_custom_call.1} parent=1 // pred_fallthru
      _
    // Predicated region
    $region6: #{tpu_custom_call.1} parent=1 // pred_check
      _
    $region7: #{tpu_custom_call.1} parent=1 // pred_check_branch
      %14 = sbr.rel (0) target = $region9
    $region8: #{tpu_custom_call.1} parent=1 // pred_region
      _
    $region9: #{tpu_custom_call.1} parent=1 // pred_fallthru
      _
    // Predicated region
    $region10: #{tpu_custom_call.1} parent=1 // pred_check
      _
    $region11: #{tpu_custom_call.1} parent=1 // pred_check_branch
      %16 = sbr.rel (0) target = $region13
    $region12: #{tpu_custom_call.1} parent=1 // pred_region
      _
    $region13: #{tpu_custom_call.1} parent=1 // pred_fallthru
      _
    // Predicated region
    $region14: #{tpu_custom_call.1} parent=1 // pred_check
      _
    $region15: #{tpu_custom_call.1} parent=1 // pred_check_branch
      %18 = sbr.rel (0) target = $region17
    $region16: #{tpu_custom_call.1} parent=1 // pred_region
      _
    $region17: #{tpu_custom_call.1} parent=1 // pred_fallthru
      _
    // Predicated region
    $region18: #{tpu_custom_call.1} parent=1 // pred_check
      _
    $region19: #{tpu_custom_call.1} parent=1 // pred_check_branch
      %20 = sbr.rel (0) target = $region21
    $region20: #{tpu_custom_call.1} parent=1 // pred_region
      _
    $region21: #{tpu_custom_call.1} parent=1 // pred_fallthru
      _
    %v21 = vld [vmem:[%s0] sm:$0xff]
    %v22 = vld [vmem:[%s1] sm:$0xff]
    %v23 = vld [vmem:[%s1 + $0x8] sm:$0xff]
    %v24 = vld [vmem:[%s1 + $0x10] sm:$0xff]
    %v25 = vld [vmem:[%s1 + $0x18] sm:$0xff]
    %v26 = vld [vmem:[%s2] sm:$0x1]
    %v28 = vlaneseq
    %v29 = vshrl.u32 %v28, 7
    %v30 = vsub.s32 0, %v29
    %v31 = vrot.slane %v26, %v30
    %vm33 = vcmask 130048
    %v35 = vsel %vm33, %v21, 0
    %v38 = vsel %vm33, %v22, 0
    %v41 = vsel %vm33, %v23, 0
    %v44 = vsel %vm33, %v24, 0
    %v47 = vsel %vm33, %v25, 0
    %49 = vmatprep.subr.mxu0 0.0
    %50 = vmatpush1.xpose.msra.mxu0 0.0
    %51 = vmatprep.subr.mxu0 0.0
    %52 = vmatpush1.xpose.msra.mxu0 0.0
    %53 = vmatprep.subr.mxu0 0.0
    %54 = vmatpush1.xpose.msra.mxu0 0.0
    %55 = vmatprep.subr.mxu0 0.0
    %56 = vmatpush1.xpose.msra.mxu0 0.0
    %57 = vmatprep.subr.mxu0 0.0
    %58 = vmatpush1.xpose.msra.mxu0 0.0
    %59 = vmatprep.subr.mxu0 0.0
    %60 = vmatpush1.xpose.msra.mxu0 0.0
    %61 = vmatprep.subr.mxu0 0.0
    %62 = vmatpush1.xpose.msra.mxu0 0.0
    %63 = vmatprep.subr.mxu0 0.0
    %64 = vmatpush1.xpose.msra.mxu0 0.0
    %65 = vmatprep.subr.mxu0 0.0
    %66 = vmatpush1.xpose.msra.mxu0 0.0
    %67 = vmatprep.subr.mxu0 0.0
    %68 = vmatpush1.xpose.msra.mxu0 0.0
    %69 = vmatprep.subr.mxu0 0.0
    %70 = vmatpush1.xpose.msra.mxu0 0.0
    %71 = vmatprep.subr.mxu0 0.0
    %72 = vmatpush1.xpose.msra.mxu0 0.0
    %73 = vmatprep.subr.mxu0 0.0
    %74 = vmatpush1.xpose.msra.mxu0 %v47
    %75 = vmatprep.subr.mxu0 0.0
    %76 = vmatpush1.xpose.msra.mxu0 %v44
    %77 = vmatprep.subr.mxu0 0.0
    %78 = vmatpush1.xpose.msra.mxu0 %v41
    %79 = vmatprep.subr.mxu0 0.0
    %80 = vmatpush1.xpose.msra.mxu0 %v38
    %81 = vmatprep.subr.mxu0 0.0
    %82 = vmatpush2.xpose.msra.mxu0 0.0
    %83 = vmatprep.subr.mxu0 0.0
    %84 = vmatpush2.xpose.msra.mxu0 0.0
    %85 = vmatprep.subr.mxu0 0.0
    %86 = vmatpush2.xpose.msra.mxu0 0.0
    %87 = vmatprep.subr.mxu0 0.0
    %88 = vmatpush2.xpose.msra.mxu0 0.0
    %89 = vmatprep.subr.mxu0 0.0
    %90 = vmatpush2.xpose.msra.mxu0 0.0
    %91 = vmatprep.subr.mxu0 0.0
    %92 = vmatpush2.xpose.msra.mxu0 0.0
    %93 = vmatprep.subr.mxu0 0.0
    %94 = vmatpush2.xpose.msra.mxu0 0.0
    %95 = vmatprep.subr.mxu0 0.0
    %96 = vmatpush2.xpose.msra.mxu0 0.0
    %97 = vmatprep.subr.mxu0 0.0
    %98 = vmatpush2.xpose.msra.mxu0 0.0
    %99 = vmatprep.subr.mxu0 0.0
    %100 = vmatpush2.xpose.msra.mxu0 0.0
    %101 = vmatprep.subr.mxu0 0.0
    %102 = vmatpush2.xpose.msra.mxu0 0.0
    %103 = vmatprep.subr.mxu0 0.0
    %104 = vmatpush2.xpose.msra.mxu0 0.0
    %105 = vmatprep.subr.mxu0 0.0
    %106 = vmatpush2.xpose.msra.mxu0 0.0
    %107 = vmatprep.subr.mxu0 0.0
    %108 = vmatpush2.xpose.msra.mxu0 0.0
    %109 = vmatprep.subr.mxu0 0.0
    %110 = vmatpush2.xpose.msra.mxu0 0.0
    %111 = vmatprep.subr.mxu0 0.0
    %112 = vmatpush2.xpose.msra.mxu0 0.0
    %113 = vmatprep.mubr.f32.mxu0 0.0
    %114 = vmatmul.mubr.f32.gmra.mxu0 %v35
    %v115 = vpop.f32.mrf.mxu0
    %v116 = vadd.f32 %v31, %v115
    %v117 = vpop.f32.mrf.mxu0
    %118 = vdwg.mxu0
    %v119 = vmax.f32 %v116, 0.0
    %v120 = vld [vmem:[%s3] sm:$0x3]
    %v121 = vld [vmem:[%s4] sm:$0x3]
    %123 = vset.pattern.permute.xlu0 0
    %124 = vperm.xlu0 %123, %v121
    %v125 = vpop.permute.xlu0 %124
    %vm127 = vcmask 261120
    %v129 = vsel %vm127, %v120, 0
    %v132 = vsel %vm127, %v119, 0
    %134 = vmatprep.subr.mxu0 0.0
    %135 = vmatpush1.xpose.msra.mxu0 0.0
    %136 = vmatprep.subr.mxu0 0.0
    %137 = vmatpush1.xpose.msra.mxu0 0.0
    %138 = vmatprep.subr.mxu0 0.0
    %139 = vmatpush1.xpose.msra.mxu0 0.0
    %140 = vmatprep.subr.mxu0 0.0
    %141 = vmatpush1.xpose.msra.mxu0 0.0
    %142 = vmatprep.subr.mxu0 0.0
    %143 = vmatpush1.xpose.msra.mxu0 0.0
    %144 = vmatprep.subr.mxu0 0.0
    %145 = vmatpush1.xpose.msra.mxu0 0.0
    %146 = vmatprep.subr.mxu0 0.0
    %147 = vmatpush1.xpose.msra.mxu0 0.0
    %148 = vmatprep.subr.mxu0 0.0
    %149 = vmatpush1.xpose.msra.mxu0 0.0
    %150 = vmatprep.subr.mxu0 0.0
    %151 = vmatpush1.xpose.msra.mxu0 0.0
    %152 = vmatprep.subr.mxu0 0.0
    %153 = vmatpush1.xpose.msra.mxu0 0.0
    %154 = vmatprep.subr.mxu0 0.0
    %155 = vmatpush1.xpose.msra.mxu0 0.0
    %156 = vmatprep.subr.mxu0 0.0
    %157 = vmatpush1.xpose.msra.mxu0 0.0
    %158 = vmatprep.subr.mxu0 0.0
    %159 = vmatpush1.xpose.msra.mxu0 0.0
    %160 = vmatprep.subr.mxu0 0.0
    %161 = vmatpush1.xpose.msra.mxu0 0.0
    %162 = vmatprep.subr.mxu0 0.0
    %163 = vmatpush1.xpose.msra.mxu0 0.0
    %164 = vmatprep.subr.mxu0 0.0
    %165 = vmatpush1.xpose.msra.mxu0 %v132
    %166 = vmatprep.subr.mxu0 0.0
    %167 = vmatpush2.xpose.msra.mxu0 0.0
    %168 = vmatprep.subr.mxu0 0.0
    %169 = vmatpush2.xpose.msra.mxu0 0.0
    %170 = vmatprep.subr.mxu0 0.0
    %171 = vmatpush2.xpose.msra.mxu0 0.0
    %172 = vmatprep.subr.mxu0 0.0
    %173 = vmatpush2.xpose.msra.mxu0 0.0
    %174 = vmatprep.subr.mxu0 0.0
    %175 = vmatpush2.xpose.msra.mxu0 0.0
    %176 = vmatprep.subr.mxu0 0.0
    %177 = vmatpush2.xpose.msra.mxu0 0.0
    %178 = vmatprep.subr.mxu0 0.0
    %179 = vmatpush2.xpose.msra.mxu0 0.0
    %180 = vmatprep.subr.mxu0 0.0
    %181 = vmatpush2.xpose.msra.mxu0 0.0
    %182 = vmatprep.subr.mxu0 0.0
    %183 = vmatpush2.xpose.msra.mxu0 0.0
    %184 = vmatprep.subr.mxu0 0.0
    %185 = vmatpush2.xpose.msra.mxu0 0.0
    %186 = vmatprep.subr.mxu0 0.0
    %187 = vmatpush2.xpose.msra.mxu0 0.0
    %188 = vmatprep.subr.mxu0 0.0
    %189 = vmatpush2.xpose.msra.mxu0 0.0
    %190 = vmatprep.subr.mxu0 0.0
    %191 = vmatpush2.xpose.msra.mxu0 0.0
    %192 = vmatprep.subr.mxu0 0.0
    %193 = vmatpush2.xpose.msra.mxu0 0.0
    %194 = vmatprep.subr.mxu0 0.0
    %195 = vmatpush2.xpose.msra.mxu0 0.0
    %196 = vmatprep.subr.mxu0 0.0
    %197 = vmatpush2.xpose.msra.mxu0 0.0
    %198 = vmatprep.mubr.f32.mxu0 0.0
    %199 = vmatmul.mubr.f32.gmra.mxu0 %v129
    %v200 = vpop.f32.mrf.mxu0
    %v201 = vadd.f32 %v125, %v200
    %v202 = vpop.f32.mrf.mxu0
    %203 = vdwg.mxu0
    %vm204 = vcmask 58368
    %205 = vst.msk [vmem:[#allocation2] sm:$0x3] %vm204, %v201
    // Predicated region
    $region22: #{tpu_custom_call.1} parent=1 // pred_check
      _
    $region23: #{tpu_custom_call.1} parent=1 // pred_check_branch
      %207 = sbr.rel (0) target = $region25
    $region24: #{tpu_custom_call.1} parent=1 // pred_region
      %s209 = ssub.s32 32, 32
      %210 = vsyncadd [#allocation3], %s209
      %s212 = sshll.u32 [#allocation2], 4
      %s213 = int_to_ptr.vmem [resolvable:$true] %s212
      %215 = dma.vmem_to_hbm [thread:$0]  %s213, 32, %s5, [#allocation3]
    $region25: #{tpu_custom_call.1} parent=1 // pred_fallthru
      _
    // Predicated region
    $region26: #{tpu_custom_call.1} parent=1 // pred_check
      _
    $region27: #{tpu_custom_call.1} parent=1 // pred_check_branch
      %217 = sbr.rel (0) target = $region29
    $region28: #{tpu_custom_call.1} parent=1 // pred_region
      %218 = dma.done [#allocation3], 32
    $region29: #{tpu_custom_call.1} parent=1 // pred_fallthru
      _
    %219 = vsyncpa [#allocation3], 1

</llo_original>
